<compile_context>
chip_gen: v7x
topology: tpu7x:2x2x1
jax: 0.10.0
libtpu: 0.0.40
codegen_flags: <defaults>
</compile_context>

<pallas_src>
import functools

import jax
import jax.numpy as jnp
from jax.experimental import pallas as pl
from jax.experimental.pallas import tpu as pltpu


def _rubi_partial_kernel(batch_size, rubi_ref, q_ref, lab_ref, out_ref):
    """Per-batch-tile partial CE sums.

    out_ref is a (1, 8, 128) VMEM tile; [0, 0, 0] holds the fusion
    (logits_rubi) partial sum, [0, 0, 1] the question (logits_q) partial sum.
    """
    i = pl.program_id(0)
    tb = rubi_ref.shape[0]

    # Rows past the true batch size (padded last tile) are masked out.
    row = jax.lax.broadcasted_iota(jnp.int32, (tb, 1), 0)
    row_valid = (i * tb + row) < batch_size                         # (tb, 1)

    labels = lab_ref[...]                                           # (tb, 1) int32
    col = jax.lax.broadcasted_iota(jnp.int32, rubi_ref.shape, 1)    # (tb, C)
    # Fold row validity into the one-hot target mask so garbage labels/logits
    # in padded rows can never be selected into the target sum.
    target_mask = (col == labels) & row_valid                       # (tb, C)

    def ce_sum(logits):
        # No full-tile pre-zero select: LSE is row-wise, so padded-row garbage
        # only reaches masked select operands, never an unmasked sum.
        x = logits.astype(jnp.float32)                              # (tb, C)
        m = jnp.max(x, axis=-1, keepdims=True)                      # (tb, 1)
        lse = m + jnp.log(jnp.sum(jnp.exp(x - m), axis=-1, keepdims=True))
        # sum_i [lse_i - x_i[target_i]] folded into two reductions.
        lse_sum = jnp.sum(jnp.where(row_valid, lse, 0.0))
        tgt_sum = jnp.sum(jnp.where(target_mask, x, 0.0))
        return lse_sum - tgt_sum

    fusion_p = ce_sum(rubi_ref[...])
    question_p = ce_sum(q_ref[...])

    # Lane-dense (8, 128) output tile: lane 0 = fusion, lane 1 = question.
    lane = jax.lax.broadcasted_iota(jnp.int32, (8, 128), 1)
    out_ref[0] = jnp.where(lane == 0, fusion_p,
                           jnp.where(lane == 1, question_p, 0.0))


def _round_up(x, m):
    return ((x + m - 1) // m) * m


def _tpu_budget():
    """Per-generation (target_tile_bytes, vmem_limit_bytes, min_tiles)."""
    vmem_cap = 128 * 1024 * 1024
    try:
        info = pltpu.get_tpu_info()
        vmem_cap = int(getattr(info, "vmem_capacity_bytes", vmem_cap))
    except Exception:
        pass
    if vmem_cap <= 64 * 1024 * 1024:
        # v7x: 64 MiB VMEM per TensorCore, 2 TCs share HBM -> smaller tiles,
        # and force >= 2 parallel grid tiles so both cores get fed.
        return 3 * 1024 * 1024, 40 * 1024 * 1024, 2
    # v5e / v6e: 128 MiB physical VMEM -> larger tiles, 64 MiB scoped limit.
    return 6 * 1024 * 1024, 64 * 1024 * 1024, 1


def _choose_batch_tile(B, C, itemsize, target_bytes, min_tiles):
    tb = max(8, target_bytes // max(C * itemsize, 1))
    tb = max(8, (tb // 8) * 8)          # sublane multiple
    if min_tiles > 1 and B > 8:
        # Cap tile so the grid has >= min_tiles steps (feeds both v7x cores).
        cap = max(8, _round_up(pl.cdiv(B, min_tiles), 8))
        tb = min(tb, cap)
    if B <= tb:
        return B                        # one tile; block dim == full batch dim
    return tb


def rubi_criterion(logits_rubi, logits_q, class_id, question_loss_weight=1.0,
                   batch_tile=None):
    """JAX wrapper mirroring RUBiCriterion.forward.

    Accepts f32 or bf16 logits; bf16 halves HBM traffic (kernel upcasts to f32).
    """
    B, C = logits_rubi.shape
    assert logits_q.shape == (B, C)
    labels2d = class_id.astype(jnp.int32).reshape(B, 1)

    itemsize = logits_rubi.dtype.itemsize
    target_bytes, vmem_limit, min_tiles = _tpu_budget()

    if batch_tile is not None:
        tb = int(batch_tile)
        if tb < B:
            tb = max(8, (tb // 8) * 8)  # guard: sublane multiple when tiling
        else:
            tb = B
    else:
        tb = _choose_batch_tile(B, C, itemsize, target_bytes, min_tiles)

    num_tiles = pl.cdiv(B, tb)

    cost = pl.CostEstimate(
        flops=8 * B * C,
        transcendentals=2 * B * C,
        bytes_accessed=2 * B * C * itemsize + B * 4 + num_tiles * 8 * 128 * 4,
    )

    kernel = functools.partial(_rubi_partial_kernel, B)
    partials = pl.pallas_call(
        kernel,
        out_shape=jax.ShapeDtypeStruct((num_tiles, 8, 128), jnp.float32),
        grid=(num_tiles,),
        in_specs=[
            pl.BlockSpec((tb, C), lambda i: (i, 0)),   # logits_rubi tile
            pl.BlockSpec((tb, C), lambda i: (i, 0)),   # logits_q tile
            pl.BlockSpec((tb, 1), lambda i: (i, 0)),   # class_id tile
        ],
        out_specs=pl.BlockSpec((1, 8, 128), lambda i: (i, 0, 0)),
        compiler_params=pltpu.CompilerParams(
            dimension_semantics=("parallel",),
            vmem_limit_bytes=vmem_limit,
        ),
        cost_estimate=cost,
    )(logits_rubi, logits_q, labels2d)

    # Tiny epilogue in plain JAX: sum per-tile partials and apply the weight
    # (keeps the weight out of the compiled kernel -> no recompiles per value).
    fusion_loss = jnp.sum(partials[:, 0, 0])
    question_loss = jnp.sum(partials[:, 0, 1])
    loss = fusion_loss + question_loss_weight * question_loss

    return {
        'loss': loss,
        'loss_mm_q': fusion_loss,
        'loss_q': question_loss,
    }


def _reference(logits_rubi, logits_q, class_id, question_loss_weight=1.0):
    def ce_sum(logits, labels):
        logp = jax.nn.log_softmax(logits.astype(jnp.float32), axis=-1)
        nll = -jnp.take_along_axis(logp, labels[:, None].astype(jnp.int32),
                                   axis=-1)[:, 0]
        return jnp.sum(nll)
    fusion = ce_sum(logits_rubi, class_id)
    question = ce_sum(logits_q, class_id)
    return fusion + question_loss_weight * question, fusion, question


def _check(out, ref):
    ref_loss, ref_fusion, ref_question = ref
    assert jnp.allclose(out['loss'], ref_loss, rtol=1e-5, atol=1e-4)
    assert jnp.allclose(out['loss_mm_q'], ref_fusion, rtol=1e-5, atol=1e-4)
    assert jnp.allclose(out['loss_q'], ref_question, rtol=1e-5, atol=1e-4)


if __name__ == "__main__":
    key = jax.random.PRNGKey(0)
    k1, k2, k3, k4, k5, k6, k7, k8, k9 = jax.random.split(key, 9)

    # Test 1: small single-tile case (batch=8, num answer classes=128).
    B, C = 8, 128
    logits_rubi = jax.random.normal(k1, (B, C), dtype=jnp.float32)
    logits_q = jax.random.normal(k2, (B, C), dtype=jnp.float32)
    class_id = jax.random.randint(k3, (B,), 0, C, dtype=jnp.int32)

    out = rubi_criterion(logits_rubi, logits_q, class_id,
                         question_loss_weight=1.0)
    jax.block_until_ready(out)
    _check(out, _reference(logits_rubi, logits_q, class_id, 1.0))

    # Test 2: exercise the batch grid + padded last tile (B=20, tile=8 -> 3 tiles).
    B2, C2 = 20, 256
    logits_rubi2 = jax.random.normal(k4, (B2, C2), dtype=jnp.float32)
    logits_q2 = jax.random.normal(k5, (B2, C2), dtype=jnp.float32)
    class_id2 = jax.random.randint(k6, (B2,), 0, C2, dtype=jnp.int32)

    out2 = rubi_criterion(logits_rubi2, logits_q2, class_id2,
                          question_loss_weight=0.5, batch_tile=8)
    jax.block_until_ready(out2)
    _check(out2, _reference(logits_rubi2, logits_q2, class_id2, 0.5))

    # Test 3: bf16 logits path (halves HBM traffic; kernel upcasts to f32).
    B3, C3 = 16, 384
    logits_rubi3 = jax.random.normal(k7, (B3, C3), dtype=jnp.bfloat16)
    logits_q3 = jax.random.normal(k8, (B3, C3), dtype=jnp.bfloat16)
    class_id3 = jax.random.randint(k9, (B3,), 0, C3, dtype=jnp.int32)

    out3 = rubi_criterion(logits_rubi3, logits_q3, class_id3,
                          question_loss_weight=2.0)
    jax.block_until_ready(out3)
    _check(out3, _reference(logits_rubi3, logits_q3, class_id3, 2.0))

    print("KERNEL_OK")
</pallas_src>

<mosaic_0001>
module attributes {stable_mosaic.version = 11 : i64} {
  func.func @_rubi_partial_kernel(%arg0: i32, %arg1: memref<8x128xf32, #tpu.memory_space<vmem>>, %arg2: memref<8x128xf32, #tpu.memory_space<vmem>>, %arg3: memref<8x1xi32, #tpu.memory_space<vmem>>, %arg4: memref<1x8x128xf32, #tpu.memory_space<vmem>>) attributes {dimension_semantics = [#tpu.dimension_semantics<parallel>], iteration_bounds = array<i64: 1>, scalar_prefetch = 0 : i64, scratch_operands = 0 : i64, tpu.core_type = #tpu.core_type<tc>, window_params = [{transform_indices = @transform_0, window_bounds = array<i64: 8, 128>}, {transform_indices = @transform_1, window_bounds = array<i64: 8, 128>}, {transform_indices = @transform_2, window_bounds = array<i64: 8, 1>}, {transform_indices = @transform_3, window_bounds = array<i64: 1, 8, 128>}]} {
    %0 = tpu.iota {dimensions = array<i32: 0>} : vector<8x1xi32>
    %c8_i32 = arith.constant 8 : i32
    %1 = arith.muli %arg0, %c8_i32 : i32
    %2 = vector.broadcast %1 : i32 to vector<8x1xi32>
    %3 = arith.addi %2, %0 : vector<8x1xi32>
    %c8_i32_0 = arith.constant 8 : i32
    %4 = vector.broadcast %c8_i32_0 : i32 to vector<8x1xi32>
    %5 = arith.cmpi slt, %3, %4 : vector<8x1xi32>
    %c0 = arith.constant 0 : index
    %c0_1 = arith.constant 0 : index
    %6 = vector.load %arg3[%c0, %c0_1] : memref<8x1xi32, #tpu.memory_space<vmem>>, vector<8x1xi32>
    %7 = tpu.iota {dimensions = array<i32: 1>} : vector<8x128xi32>
    %8 = vector.broadcast %6 : vector<8x1xi32> to vector<8x128xi32>
    %9 = arith.cmpi eq, %7, %8 : vector<8x128xi32>
    %10 = vector.broadcast %5 : vector<8x1xi1> to vector<8x128xi1>
    %11 = arith.andi %9, %10 : vector<8x128xi1>
    %c0_2 = arith.constant 0 : index
    %c0_3 = arith.constant 0 : index
    %12 = vector.load %arg1[%c0_2, %c0_3] : memref<8x128xf32, #tpu.memory_space<vmem>>, vector<8x128xf32>
    %cst = arith.constant dense<0xFF800000> : vector<8xf32>
    %13 = vector.multi_reduction <maximumf>, %12, %cst [1] : vector<8x128xf32> to vector<8xf32>
    %14 = vector.shape_cast %13 : vector<8xf32> to vector<8x1xf32>
    %15 = vector.broadcast %14 : vector<8x1xf32> to vector<8x128xf32>
    %16 = arith.subf %12, %15 : vector<8x128xf32>
    %17 = math.exp %16 : vector<8x128xf32>
    %cst_4 = arith.constant dense<0.000000e+00> : vector<8xf32>
    %18 = vector.multi_reduction <add>, %17, %cst_4 [1] : vector<8x128xf32> to vector<8xf32>
    %19 = vector.shape_cast %18 : vector<8xf32> to vector<8x1xf32>
    %20 = math.log %19 : vector<8x1xf32>
    %21 = arith.addf %14, %20 : vector<8x1xf32>
    %cst_5 = arith.constant 0.000000e+00 : f32
    %22 = vector.broadcast %cst_5 : f32 to vector<8x1xf32>
    %23 = arith.select %5, %21, %22 : vector<8x1xi1>, vector<8x1xf32>
    %24 = vector.shape_cast %23 : vector<8x1xf32> to vector<1x8x1xf32>
    %cst_6 = arith.constant dense<0.000000e+00> : vector<1xf32>
    %25 = vector.multi_reduction <add>, %24, %cst_6 [1, 2] : vector<1x8x1xf32> to vector<1xf32>
    %26 = vector.shape_cast %25 : vector<1xf32> to vector<1x1x1xf32>
    %27 = vector.extract %26[0, 0, 0] : f32 from vector<1x1x1xf32>
    %cst_7 = arith.constant 0.000000e+00 : f32
    %28 = vector.broadcast %cst_7 : f32 to vector<8x128xf32>
    %29 = arith.select %11, %12, %28 : vector<8x128xi1>, vector<8x128xf32>
    %30 = vector.shape_cast %29 : vector<8x128xf32> to vector<1x8x128xf32>
    %cst_8 = arith.constant dense<0.000000e+00> : vector<1xf32>
    %31 = vector.multi_reduction <add>, %30, %cst_8 [1, 2] : vector<1x8x128xf32> to vector<1xf32>
    %32 = vector.shape_cast %31 : vector<1xf32> to vector<1x1x1xf32>
    %33 = vector.extract %32[0, 0, 0] : f32 from vector<1x1x1xf32>
    %34 = arith.subf %27, %33 : f32
    %c0_9 = arith.constant 0 : index
    %c0_10 = arith.constant 0 : index
    %35 = vector.load %arg2[%c0_9, %c0_10] : memref<8x128xf32, #tpu.memory_space<vmem>>, vector<8x128xf32>
    %cst_11 = arith.constant dense<0xFF800000> : vector<8xf32>
    %36 = vector.multi_reduction <maximumf>, %35, %cst_11 [1] : vector<8x128xf32> to vector<8xf32>
    %37 = vector.shape_cast %36 : vector<8xf32> to vector<8x1xf32>
    %38 = vector.broadcast %37 : vector<8x1xf32> to vector<8x128xf32>
    %39 = arith.subf %35, %38 : vector<8x128xf32>
    %40 = math.exp %39 : vector<8x128xf32>
    %cst_12 = arith.constant dense<0.000000e+00> : vector<8xf32>
    %41 = vector.multi_reduction <add>, %40, %cst_12 [1] : vector<8x128xf32> to vector<8xf32>
    %42 = vector.shape_cast %41 : vector<8xf32> to vector<8x1xf32>
    %43 = math.log %42 : vector<8x1xf32>
    %44 = arith.addf %37, %43 : vector<8x1xf32>
    %cst_13 = arith.constant 0.000000e+00 : f32
    %45 = vector.broadcast %cst_13 : f32 to vector<8x1xf32>
    %46 = arith.select %5, %44, %45 : vector<8x1xi1>, vector<8x1xf32>
    %47 = vector.shape_cast %46 : vector<8x1xf32> to vector<1x8x1xf32>
    %cst_14 = arith.constant dense<0.000000e+00> : vector<1xf32>
    %48 = vector.multi_reduction <add>, %47, %cst_14 [1, 2] : vector<1x8x1xf32> to vector<1xf32>
    %49 = vector.shape_cast %48 : vector<1xf32> to vector<1x1x1xf32>
    %50 = vector.extract %49[0, 0, 0] : f32 from vector<1x1x1xf32>
    %cst_15 = arith.constant 0.000000e+00 : f32
    %51 = vector.broadcast %cst_15 : f32 to vector<8x128xf32>
    %52 = arith.select %11, %35, %51 : vector<8x128xi1>, vector<8x128xf32>
    %53 = vector.shape_cast %52 : vector<8x128xf32> to vector<1x8x128xf32>
    %cst_16 = arith.constant dense<0.000000e+00> : vector<1xf32>
    %54 = vector.multi_reduction <add>, %53, %cst_16 [1, 2] : vector<1x8x128xf32> to vector<1xf32>
    %55 = vector.shape_cast %54 : vector<1xf32> to vector<1x1x1xf32>
    %56 = vector.extract %55[0, 0, 0] : f32 from vector<1x1x1xf32>
    %57 = arith.subf %50, %56 : f32
    %58 = tpu.iota {dimensions = array<i32: 1>} : vector<8x128xi32>
    %c0_i32 = arith.constant 0 : i32
    %59 = vector.broadcast %c0_i32 : i32 to vector<8x128xi32>
    %60 = arith.cmpi eq, %58, %59 : vector<8x128xi32>
    %c1_i32 = arith.constant 1 : i32
    %61 = vector.broadcast %c1_i32 : i32 to vector<8x128xi32>
    %62 = arith.cmpi eq, %58, %61 : vector<8x128xi32>
    %cst_17 = arith.constant 0.000000e+00 : f32
    %63 = vector.broadcast %57 : f32 to vector<8x128xf32>
    %64 = vector.broadcast %cst_17 : f32 to vector<8x128xf32>
    %65 = arith.select %62, %63, %64 : vector<8x128xi1>, vector<8x128xf32>
    %66 = vector.broadcast %34 : f32 to vector<8x128xf32>
    %67 = arith.select %60, %66, %65 : vector<8x128xi1>, vector<8x128xf32>
    %c0_18 = arith.constant 0 : index
    %c0_19 = arith.constant 0 : index
    %c0_20 = arith.constant 0 : index
    %68 = vector.load %arg4[%c0_18, %c0_19, %c0_20] : memref<1x8x128xf32, #tpu.memory_space<vmem>>, vector<1x8x128xf32>
    %69 = vector.shape_cast %68 : vector<1x8x128xf32> to vector<8x128xf32>
    %70 = vector.shape_cast %67 : vector<8x128xf32> to vector<1x8x128xf32>
    tpu.vector_store %arg4[%c0_18, %c0_19, %c0_20], %70 {strides = array<i32>} : memref<1x8x128xf32, #tpu.memory_space<vmem>>, vector<1x8x128xf32>,
    return
  }
  func.func @transform_0(%arg0: i32) -> (i32, i32) {
    %c0_i32 = arith.constant 0 : i32
    %c0_i32_0 = arith.constant 0 : i32
    return %arg0, %c0_i32 : i32, i32
  }
  func.func @transform_1(%arg0: i32) -> (i32, i32) {
    %c0_i32 = arith.constant 0 : i32
    %c0_i32_0 = arith.constant 0 : i32
    return %arg0, %c0_i32 : i32, i32
  }
  func.func @transform_2(%arg0: i32) -> (i32, i32) {
    %c0_i32 = arith.constant 0 : i32
    %c0_i32_0 = arith.constant 0 : i32
    return %arg0, %c0_i32 : i32, i32
  }
  func.func @transform_3(%arg0: i32) -> (i32, i32, i32) {
    %c0_i32 = arith.constant 0 : i32
    %c0_i32_0 = arith.constant 0 : i32
    %c0_i32_1 = arith.constant 0 : i32
    return %arg0, %c0_i32, %c0_i32_0 : i32, i32, i32
  }
}

</mosaic_0001>

<llo_original>
// kernel: tpu_custom_call.1
$region0: #{tpu_custom_call.1}
  #allocation0 [shape = 'u32[]', space=smem, size = 0x4, offset = 0x4, fixed_abs, tag = 'smem constant byte address 0x4 - core index']
  #allocation1 [shape = 'u32[144,128]{1,0:T(1,128)}', space=vmem, size = 0x12000, scoped, tag = 'internal scratch']
  %s0 = inlined_call_operand.hbm [shape: f32[8,128], index: 0, kind: input, shape index: {}]
  %s1 = inlined_call_operand.hbm [shape: f32[8,128], index: 1, kind: input, shape index: {}]
  %s2 = inlined_call_operand.hbm [shape: s32[8,1], index: 2, kind: input, shape index: {}]
  %s3 = inlined_call_operand.hbm [shape: f32[1,8,128], index: 3, kind: output, shape index: {}]
  %s4 = sld [smem:[#allocation0]]
  $region34: #{tpu_custom_call.1} parent=0
    _
  %s6 = ssub.s32 1, %s4
  %s7 = scalar_select 0, %s6, %s4
  $region1: #{tpu_custom_call.1} parent=0
    #allocation2 [shape = 'u8[4096]{0}', space=vmem, size = 0x1000, scoped, tag = 'input window, operand 0, single buffered']
    #allocation3 [shape = 's32[1]{0}', space=sflag, size = 0x4, scoped, tag = 'scoped memory for tpu_custom_call.1']
    #allocation4 [shape = 's32[1]{0}', space=sflag, size = 0x4, scoped, tag = 'scoped memory for tpu_custom_call.1']
    #allocation5 [shape = 'u8[4096]{0}', space=vmem, size = 0x1000, scoped, tag = 'input window, operand 1, single buffered']
    #allocation6 [shape = 's32[1]{0}', space=sflag, size = 0x4, scoped, tag = 'scoped memory for tpu_custom_call.1']
    #allocation7 [shape = 'u8[4096]{0}', space=vmem, size = 0x1000, scoped, tag = 'input window, operand 2, single buffered']
    #allocation8 [shape = 'u8[4096]{0}', space=vmem, size = 0x1000, scoped, tag = 'output window, operand 0, single buffered']
    %8 = vsyncpa [#allocation3], 0
    %9 = vsyncpa [#allocation6], 0
    %10 = vsyncpa [#allocation4], 0
    // Predicated region
    $region2: #{tpu_custom_call.1} parent=1 // pred_check
      _
    $region3: #{tpu_custom_call.1} parent=1 // pred_check_branch
      %12 = sbr.rel (0) target = $region5
    $region4: #{tpu_custom_call.1} parent=1 // pred_region
      %s14 = ssub.s32 128, 128
      %15 = vsyncadd [#allocation3], %s14
      %s17 = sshll.u32 [#allocation2], 4
      %s18 = int_to_ptr.vmem [resolvable:$true] %s17
      %20 = dma.hbm_to_vmem [thread:$0]  %s0, 128, %s18, [#allocation3]
    $region5: #{tpu_custom_call.1} parent=1 // pred_fallthru
      _
    // Predicated region
    $region6: #{tpu_custom_call.1} parent=1 // pred_check
      _
    $region7: #{tpu_custom_call.1} parent=1 // pred_check_branch
      %22 = sbr.rel (0) target = $region9
    $region8: #{tpu_custom_call.1} parent=1 // pred_region
      %s24 = ssub.s32 128, 128
      %25 = vsyncadd [#allocation6], %s24
      %s27 = sshll.u32 [#allocation5], 4
      %s28 = int_to_ptr.vmem [resolvable:$true] %s27
      %30 = dma.hbm_to_vmem [thread:$0]  %s1, 128, %s28, [#allocation6]
    $region9: #{tpu_custom_call.1} parent=1 // pred_fallthru
      _
    // Predicated region
    $region10: #{tpu_custom_call.1} parent=1 // pred_check
      _
    $region11: #{tpu_custom_call.1} parent=1 // pred_check_branch
      %32 = sbr.rel (0) target = $region13
    $region12: #{tpu_custom_call.1} parent=1 // pred_region
      %s34 = ssub.s32 128, 128
      %35 = vsyncadd [#allocation6], %s34
      %s37 = sshll.u32 [#allocation7], 4
      %s38 = int_to_ptr.vmem [resolvable:$true] %s37
      %40 = dma.hbm_to_vmem [thread:$0]  %s2, 128, %s38, [#allocation6]
    $region13: #{tpu_custom_call.1} parent=1 // pred_fallthru
      _
    // Predicated region
    $region14: #{tpu_custom_call.1} parent=1 // pred_check
      _
    $region15: #{tpu_custom_call.1} parent=1 // pred_check_branch
      %42 = sbr.rel (0) target = $region17
    $region16: #{tpu_custom_call.1} parent=1 // pred_region
      %43 = dma.done [#allocation3], 128
    $region17: #{tpu_custom_call.1} parent=1 // pred_fallthru
      _
    // Predicated region
    $region18: #{tpu_custom_call.1} parent=1 // pred_check
      _
    $region19: #{tpu_custom_call.1} parent=1 // pred_check_branch
      %45 = sbr.rel (0) target = $region21
    $region20: #{tpu_custom_call.1} parent=1 // pred_region
      %46 = dma.done [#allocation6], 128
    $region21: #{tpu_custom_call.1} parent=1 // pred_fallthru
      _
    // Predicated region
    $region22: #{tpu_custom_call.1} parent=1 // pred_check
      _
    $region23: #{tpu_custom_call.1} parent=1 // pred_check_branch
      %48 = sbr.rel (0) target = $region25
    $region24: #{tpu_custom_call.1} parent=1 // pred_region
      %49 = dma.done [#allocation6], 128
    $region25: #{tpu_custom_call.1} parent=1 // pred_fallthru
      _
    %v50 = vlaneseq
    %v51 = vshrl.u32 %v50, 7
    %s52 = smul.u32 0, 8
    %v53 = vstv %s52
    %v54 = vadd.s32 %v53, %v51
    %vm55 = vcmp.lt.s32.totalorder %v54, 8
    %v56 = vld [vmem:[#allocation7] sm:$0xff]
    %v57 = vlaneseq
    %v58 = vand.u32 %v57, 127
    %59 = vset.pattern.permute.xlu0 0
    %60 = vperm.xlu0 %59, %v56
    %v61 = vpop.permute.xlu0 %60
    %vm62 = vcmp.eq.s32.totalorder %v58, %v61
    %v63 = vsel %vm55, 1, 0
    %vm64 = vcmp.eq.s32.totalorder %v63, 1
    %vm65 = vmand %vm62, %vm64
    %v66 = vld [vmem:[#allocation2] sm:$0xff]
    %67 = vmax.xlane.f32.xlu0 %v66
    %v68 = vpop.xlane.xlu0 %67
    %v69 = vsub.f32 %v66, %v68
    %v70 = vmul.f32 %v69, 1.442695
    %v71 = vpow.pop %v70
    %72 = vadd.xlane.f32.xlu0 %v71
    %v73 = vpop.xlane.xlu0 %72
    %v74 = vlog2.pop %v73
    %v75 = vmul.f32 %v74, 0.6931472
    %v76 = vadd.f32 %v68, %v75
    %v77 = vsel %vm55, %v76, 0.0
    %vm78 = vcmask 7168
    %v79 = vsel %vm78, %v77, 0.0
    %80 = vadd.xlane.f32.xlu0 %v79
    %v81 = vpop.xlane.xlu0 %80
    %v82 = vrot.slane %v81, 4
    %v83 = vadd.f32 %v81, %v82
    %v84 = vrot.slane %v83, 2
    %v85 = vadd.f32 %v83, %v84
    %v86 = vrot.slane %v85, 1
    %v87 = vadd.f32 %v85, %v86
    %s88 = vtos %v87
    %v89 = vsel %vm65, %v66, 0.0
    %90 = vadd.xlane.f32.xlu0 %v89
    %v91 = vpop.xlane.xlu0 %90
    %v92 = vrot.slane %v91, 4
    %v93 = vadd.f32 %v91, %v92
    %v94 = vrot.slane %v93, 2
    %v95 = vadd.f32 %v93, %v94
    %v96 = vrot.slane %v95, 1
    %v97 = vadd.f32 %v95, %v96
    %s98 = vtos %v97
    %s99 = ssub.f32 %s88, %s98
    %v100 = vld [vmem:[#allocation5] sm:$0xff]
    %101 = vmax.xlane.f32.xlu0 %v100
    %v102 = vpop.xlane.xlu0 %101
    %v103 = vsub.f32 %v100, %v102
    %v104 = vmul.f32 %v103, 1.442695
    %v105 = vpow.pop %v104
    %106 = vadd.xlane.f32.xlu0 %v105
    %v107 = vpop.xlane.xlu0 %106
    %v108 = vlog2.pop %v107
    %v109 = vmul.f32 %v108, 0.6931472
    %v110 = vadd.f32 %v102, %v109
    %v111 = vsel %vm55, %v110, 0.0
    %v112 = vsel %vm78, %v111, 0.0
    %113 = vadd.xlane.f32.xlu0 %v112
    %v114 = vpop.xlane.xlu0 %113
    %v115 = vrot.slane %v114, 4
    %v116 = vadd.f32 %v114, %v115
    %v117 = vrot.slane %v116, 2
    %v118 = vadd.f32 %v116, %v117
    %v119 = vrot.slane %v118, 1
    %v120 = vadd.f32 %v118, %v119
    %s121 = vtos %v120
    %v122 = vsel %vm65, %v100, 0.0
    %123 = vadd.xlane.f32.xlu0 %v122
    %v124 = vpop.xlane.xlu0 %123
    %v125 = vrot.slane %v124, 4
    %v126 = vadd.f32 %v124, %v125
    %v127 = vrot.slane %v126, 2
    %v128 = vadd.f32 %v126, %v127
    %v129 = vrot.slane %v128, 1
    %v130 = vadd.f32 %v128, %v129
    %s131 = vtos %v130
    %s132 = ssub.f32 %s121, %s131
    %vm133 = vcmp.eq.s32.totalorder %v58, 0
    %vm134 = vcmp.eq.s32.totalorder %v58, 1
    %v135 = vstv %s132
    %v136 = vsel %vm134, %v135, 0.0
    %v137 = vstv %s99
    %v138 = vsel %vm133, %v137, %v136
    %139 = vst [vmem:[#allocation8] sm:$0xff] %v138
    // Predicated region
    $region26: #{tpu_custom_call.1} parent=1 // pred_check
      _
    $region27: #{tpu_custom_call.1} parent=1 // pred_check_branch
      %141 = sbr.rel (0) target = $region29
    $region28: #{tpu_custom_call.1} parent=1 // pred_region
      %s143 = ssub.s32 128, 128
      %144 = vsyncadd [#allocation4], %s143
      %s146 = sshll.u32 [#allocation8], 4
      %s147 = int_to_ptr.vmem [resolvable:$true] %s146
      %149 = dma.vmem_to_hbm [thread:$0]  %s147, 128, %s3, [#allocation4]
    $region29: #{tpu_custom_call.1} parent=1 // pred_fallthru
      _
    // Predicated region
    $region30: #{tpu_custom_call.1} parent=1 // pred_check
      _
    $region31: #{tpu_custom_call.1} parent=1 // pred_check_branch
      %151 = sbr.rel (0) target = $region33
    $region32: #{tpu_custom_call.1} parent=1 // pred_region
      %152 = dma.done [#allocation4], 128
    $region33: #{tpu_custom_call.1} parent=1 // pred_fallthru
      _
    %153 = vsyncpa [#allocation3], 1
    %154 = vsyncpa [#allocation6], 1
    %155 = vsyncpa [#allocation4], 1

</llo_original>
